<compile_context>
chip_gen: v7x
topology: tpu7x:2x2x1
jax: 0.10.0
libtpu: 0.0.40
codegen_flags: <defaults>
</compile_context>

<pallas_src>
import functools

import jax
import jax.numpy as jnp
from jax import lax
from jax.experimental import pallas as pl
from jax.experimental.pallas import tpu as pltpu


def _layernorm2d_kernel(x_ref, wb_ref, o_ref, *, eps, inv_c):
    # x_ref:  (C, T)    channels on sublanes, spatial positions on lanes
    # wb_ref: (2, C, 1) stacked [weight; bias], resident across the grid
    # Pass 1: per-lane channel statistics, fp32 accumulation.  Only the
    # (1, T) stats stay live past this block.
    xf = x_ref[...].astype(jnp.float32)
    sx = jnp.sum(xf, axis=0, keepdims=True)          # (1, T)
    sxx = jnp.sum(xf * xf, axis=0, keepdims=True)    # (1, T)
    u = sx * inv_c                                   # mean over channels
    var = jnp.maximum(sxx * inv_c - u * u, 0.0)      # biased variance (fp32)
    inv = lax.rsqrt(var + eps)                       # EUP rsqrt

    # Pass 2: re-read the input block (cheap VMEM vld) and stream the epilogue
    # so no full-tile fp32 copy has to survive the reduction (no spills).
    w = wb_ref[0].astype(jnp.float32)                # (C, 1)
    b = wb_ref[1].astype(jnp.float32)                # (C, 1)
    x2 = x_ref[...].astype(jnp.float32)
    o_ref[...] = ((x2 - u) * inv * w + b).astype(o_ref.dtype)


def _round_up(v, m):
    return ((v + m - 1) // m) * m


def _round_down(v, m):
    return (v // m) * m


def _vmem_capacity_bytes():
    """Physical VMEM per TensorCore; conservative 64 MiB fallback (v7x)."""
    try:
        info = pltpu.get_tpu_info()
        cap = getattr(info, "vmem_capacity_bytes", None)
        if cap:
            return int(cap)
    except Exception:
        pass
    return 64 * 1024 * 1024


def _pick_hw_tile(hw, c, n_batch, dtype_bytes, vmem_budget_bytes,
                  target_step_bytes=4 << 20):
    """Fixed 128-multiple lane tile; ragged last block handled by cdiv grid."""
    hw_aligned = _round_up(hw, 128)
    # Traffic-driven target: ~target_step_bytes of (in + out) HBM traffic/step.
    per_lane_traffic = 2 * c * dtype_bytes
    t_traffic = _round_up(
        max(1024, target_step_bytes // max(per_lane_traffic, 1)), 128)
    # VMEM-driven cap: double-buffered input + output blocks must fit.
    per_lane_vmem = 2 * 2 * c * dtype_bytes
    t_vmem = max(
        _round_down(int(0.8 * vmem_budget_bytes) // max(per_lane_vmem, 1), 128),
        128)
    tile = max(min(t_traffic, t_vmem, 4096, hw_aligned), 128)
    # Megacore: guarantee >= 2 grid iterations so both v7x TCs get work.
    if n_batch * pl.cdiv(hw, tile) < 2 and hw > 128:
        tile = max(_round_up(pl.cdiv(hw, 2), 128), 128)
    return tile


def layernorm2d(x, weight, bias, *, eps=1e-6, vmem_limit_bytes=None):
    """x: (N, C, H, W) NCHW, weight/bias: (C,). Returns (N, C, H, W)."""
    N, C, H, W = x.shape
    HW = H * W

    # NCHW -> (N, C, H*W): contiguous merge of the last two dims, no HBM pass.
    x3 = x.reshape(N, C, HW)
    # Single resident parameter block: (2, C, 1) = [weight; bias].
    wb = jnp.stack([weight, bias], axis=0).reshape(2, C, 1)

    dtype_bytes = jnp.dtype(x.dtype).itemsize
    vmem_cap = _vmem_capacity_bytes()
    # Leave headroom (compiler scratch / semaphores); ~48 MiB on v7x, ~96 MiB
    # on v5e/v6e.
    vmem_budget = min(int(0.75 * vmem_cap), 100 * 1024 * 1024)

    hw_tile = _pick_hw_tile(HW, C, N, dtype_bytes, vmem_budget)
    grid = (N, pl.cdiv(HW, hw_tile))

    if vmem_limit_bytes is None:
        block_bytes = C * hw_tile * dtype_bytes
        wb_bytes = 2 * _round_up(C, 8) * 128 * 4      # lane-padded params
        footprint = 4 * block_bytes + 2 * wb_bytes + (2 << 20)
        vmem_limit_bytes = int(min(vmem_budget,
                                   max(footprint, 16 * 1024 * 1024)))

    out3 = pl.pallas_call(
        functools.partial(_layernorm2d_kernel, eps=eps, inv_c=1.0 / C),
        out_shape=jax.ShapeDtypeStruct((N, C, HW), x.dtype),
        grid_spec=pltpu.PrefetchScalarGridSpec(
            num_scalar_prefetch=0,
            grid=grid,
            in_specs=[
                # Squeeze the batch dim; channels full-extent, spatial tiled.
                pl.BlockSpec((None, C, hw_tile), lambda n, j: (n, 0, j)),
                # Constant index_map -> params stay resident in VMEM.
                pl.BlockSpec((2, C, 1), lambda n, j: (0, 0, 0)),
            ],
            out_specs=pl.BlockSpec((None, C, hw_tile), lambda n, j: (n, 0, j)),
        ),
        compiler_params=pltpu.CompilerParams(
            dimension_semantics=("parallel", "parallel"),
            vmem_limit_bytes=vmem_limit_bytes,
        ),
    )(x3, wb)

    return out3.reshape(N, C, H, W)


def layernorm2d_ref(x, weight, bias, eps=1e-6):
    """Pure-JAX reference matching the PyTorch module semantics."""
    u = jnp.mean(x, axis=1, keepdims=True)
    s = jnp.mean((x - u) ** 2, axis=1, keepdims=True)
    xn = (x - u) / jnp.sqrt(s + eps)
    return weight[None, :, None, None] * xn + bias[None, :, None, None]


if __name__ == "__main__":
    key = jax.random.PRNGKey(0)
    kx, kw, kb = jax.random.split(key, 3)
    N, C, H, W = 2, 4, 16, 16

    x = jax.random.normal(kx, (N, C, H, W), dtype=jnp.float32)
    weight = 1.0 + 0.1 * jax.random.normal(kw, (C,), dtype=jnp.float32)
    bias = 0.1 * jax.random.normal(kb, (C,), dtype=jnp.float32)

    out = layernorm2d(x, weight, bias, eps=1e-6)
    out = jax.block_until_ready(out)

    ref = layernorm2d_ref(x, weight, bias, eps=1e-6)
    assert out.shape == (N, C, H, W)
    assert jnp.allclose(out, ref, atol=1e-5, rtol=1e-5)

    print("KERNEL_OK")
</pallas_src>

<mosaic_0001>
module attributes {stable_mosaic.version = 11 : i64} {
  func.func @_layernorm2d_kernel(%arg0: i32, %arg1: i32, %arg2: memref<1x4x256xf32, #tpu.memory_space<vmem>>, %arg3: memref<2x4x1xf32, #tpu.memory_space<vmem>>, %arg4: memref<1x4x256xf32, #tpu.memory_space<vmem>>) attributes {dimension_semantics = [#tpu.dimension_semantics<parallel>, #tpu.dimension_semantics<parallel>], iteration_bounds = array<i64: 2, 1>, scalar_prefetch = 0 : i64, scratch_operands = 0 : i64, tpu.core_type = #tpu.core_type<tc>, window_params = [{transform_indices = @transform_0, window_bounds = array<i64: 1, 4, 256>}, {pipeline_mode = #tpu.pipeline_mode<synchronous>, transform_indices = @transform_1, window_bounds = array<i64: 2, 4, 1>}, {transform_indices = @transform_2, window_bounds = array<i64: 1, 4, 256>}]} {
    %c0 = arith.constant 0 : index
    %c0_0 = arith.constant 0 : index
    %c0_1 = arith.constant 0 : index
    %0 = vector.load %arg2[%c0, %c0_0, %c0_1] : memref<1x4x256xf32, #tpu.memory_space<vmem>>, vector<1x4x256xf32>
    %1 = vector.shape_cast %0 : vector<1x4x256xf32> to vector<4x256xf32>
    %cst = arith.constant dense<0.000000e+00> : vector<256xf32>
    %2 = vector.multi_reduction <add>, %1, %cst [0] : vector<4x256xf32> to vector<256xf32>
    %3 = vector.shape_cast %2 : vector<256xf32> to vector<1x256xf32>
    %4 = arith.mulf %1, %1 : vector<4x256xf32>
    %cst_2 = arith.constant dense<0.000000e+00> : vector<256xf32>
    %5 = vector.multi_reduction <add>, %4, %cst_2 [0] : vector<4x256xf32> to vector<256xf32>
    %6 = vector.shape_cast %5 : vector<256xf32> to vector<1x256xf32>
    %cst_3 = arith.constant 2.500000e-01 : f32
    %7 = vector.broadcast %cst_3 : f32 to vector<1x256xf32>
    %8 = arith.mulf %3, %7 : vector<1x256xf32>
    %cst_4 = arith.constant 2.500000e-01 : f32
    %9 = vector.broadcast %cst_4 : f32 to vector<1x256xf32>
    %10 = arith.mulf %6, %9 : vector<1x256xf32>
    %11 = arith.mulf %8, %8 : vector<1x256xf32>
    %12 = arith.subf %10, %11 : vector<1x256xf32>
    %cst_5 = arith.constant 0.000000e+00 : f32
    %13 = vector.broadcast %cst_5 : f32 to vector<1x256xf32>
    %14 = arith.maximumf %12, %13 : vector<1x256xf32>
    %cst_6 = arith.constant 9.99999997E-7 : f32
    %15 = vector.broadcast %cst_6 : f32 to vector<1x256xf32>
    %16 = arith.addf %14, %15 : vector<1x256xf32>
    %17 = math.rsqrt %16 : vector<1x256xf32>
    %c0_7 = arith.constant 0 : index
    %c0_8 = arith.constant 0 : index
    %c0_9 = arith.constant 0 : index
    %18 = vector.load %arg3[%c0_7, %c0_8, %c0_9] : memref<2x4x1xf32, #tpu.memory_space<vmem>>, vector<1x4x1xf32>
    %19 = vector.shape_cast %18 : vector<1x4x1xf32> to vector<4x1xf32>
    %c1 = arith.constant 1 : index
    %c0_10 = arith.constant 0 : index
    %c0_11 = arith.constant 0 : index
    %20 = vector.load %arg3[%c1, %c0_10, %c0_11] : memref<2x4x1xf32, #tpu.memory_space<vmem>>, vector<1x4x1xf32>
    %21 = vector.shape_cast %20 : vector<1x4x1xf32> to vector<4x1xf32>
    %c0_12 = arith.constant 0 : index
    %c0_13 = arith.constant 0 : index
    %c0_14 = arith.constant 0 : index
    %22 = vector.load %arg2[%c0_12, %c0_13, %c0_14] : memref<1x4x256xf32, #tpu.memory_space<vmem>>, vector<1x4x256xf32>
    %23 = vector.shape_cast %22 : vector<1x4x256xf32> to vector<4x256xf32>
    %24 = vector.broadcast %8 : vector<1x256xf32> to vector<4x256xf32>
    %25 = arith.subf %23, %24 : vector<4x256xf32>
    %26 = vector.broadcast %17 : vector<1x256xf32> to vector<4x256xf32>
    %27 = arith.mulf %25, %26 : vector<4x256xf32>
    %28 = vector.broadcast %19 : vector<4x1xf32> to vector<4x256xf32>
    %29 = arith.mulf %27, %28 : vector<4x256xf32>
    %30 = vector.broadcast %21 : vector<4x1xf32> to vector<4x256xf32>
    %31 = arith.addf %29, %30 : vector<4x256xf32>
    %c0_15 = arith.constant 0 : index
    %c0_16 = arith.constant 0 : index
    %c0_17 = arith.constant 0 : index
    %32 = vector.load %arg4[%c0_15, %c0_16, %c0_17] : memref<1x4x256xf32, #tpu.memory_space<vmem>>, vector<1x4x256xf32>
    %33 = vector.shape_cast %32 : vector<1x4x256xf32> to vector<4x256xf32>
    %34 = vector.shape_cast %31 : vector<4x256xf32> to vector<1x4x256xf32>
    tpu.vector_store %arg4[%c0_15, %c0_16, %c0_17], %34 {strides = array<i32>} : memref<1x4x256xf32, #tpu.memory_space<vmem>>, vector<1x4x256xf32>,
    return
  }
  func.func @transform_0(%arg0: i32, %arg1: i32) -> (i32, i32, i32) {
    %c0_i32 = arith.constant 0 : i32
    %c0_i32_0 = arith.constant 0 : i32
    return %arg0, %c0_i32, %arg1 : i32, i32, i32
  }
  func.func @transform_1(%arg0: i32, %arg1: i32) -> (i32, i32, i32) {
    %c0_i32 = arith.constant 0 : i32
    %c0_i32_0 = arith.constant 0 : i32
    %c0_i32_1 = arith.constant 0 : i32
    %c0_i32_2 = arith.constant 0 : i32
    return %c0_i32, %c0_i32_0, %c0_i32_1 : i32, i32, i32
  }
  func.func @transform_2(%arg0: i32, %arg1: i32) -> (i32, i32, i32) {
    %c0_i32 = arith.constant 0 : i32
    %c0_i32_0 = arith.constant 0 : i32
    return %arg0, %c0_i32, %arg1 : i32, i32, i32
  }
}

</mosaic_0001>

<llo_original>
// kernel: tpu_custom_call.1
$region0: #{tpu_custom_call.1}
  #allocation0 [shape = 'u32[]', space=smem, size = 0x4, offset = 0x4, fixed_abs, tag = 'smem constant byte address 0x4 - core index']
  #allocation1 [shape = 'u32[144,128]{1,0:T(1,128)}', space=vmem, size = 0x12000, scoped, tag = 'internal scratch']
  %s0 = inlined_call_operand.hbm [shape: f32[2,4,256], index: 0, kind: input, shape index: {}]
  %s1 = inlined_call_operand.vmem [shape: f32[2,4,1], index: 1, kind: input, shape index: {}]
  %s2 = inlined_call_operand.hbm [shape: f32[2,4,256], index: 2, kind: output, shape index: {}]
  %s3 = sld [smem:[#allocation0]]
  $region45: #{tpu_custom_call.1} parent=0
    _
  %s5 = ssub.s32 1, %s3
  %s6 = scalar_select 0, %s5, %s3
  $region1: #{tpu_custom_call.1} parent=0
    #allocation2 [shape = 'u8[8192]{0}', space=vmem, size = 0x2000, scoped, tag = 'input window, operand 0']
    #allocation3 [shape = 's32[2]{0}', space=sflag, size = 0x8, scoped, tag = 'scoped memory for tpu_custom_call.1']
    #allocation4 [shape = 's32[2]{0}', space=sflag, size = 0x8, scoped, tag = 'scoped memory for tpu_custom_call.1']
    #allocation5 [shape = 'u8[8192]{0}', space=vmem, size = 0x2000, scoped, tag = 'output window, operand 0']
    %7 = vsyncpa [#allocation3], 0
    %s8 = scalar_lea.sflag [#allocation3], 1
    %9 = vsyncpa %s8, 0
    %10 = vsyncpa [#allocation4], 0
    %s11 = scalar_lea.sflag [#allocation4], 1
    %12 = vsyncpa %s11, 0
    loop: start=0, step=1, limit=4
    $region2: #{tpu_custom_call.1} parent=1 // loop_pre_header
      _
    $region3: #{tpu_custom_call.1} parent=1 // loop_header
      %s14 = sphi 0, %s18
      %p15 = scmp.ge.s32.totalorder %s14, 4
      %s21 = sphi 0, %s33
      %s22 = sphi 0, %s29
      %s23 = sphi 0, %s21
      %s24 = sphi 0, %s22
      %s25 = sphi 0, %s23
      %s26 = sphi 0, %s24
      %s38 = sphi 0, %s40
      %s41 = sphi 0, %s38
      %s42 = sphi 0, %s41
      %s58 = sphi 0, %s42
      %s62 = sphi 0, %s62
      %s64 = sphi 0, %s62
      %s65 = sphi 0, %s64
      %s79 = sphi 0, %s65
      %s87 = sphi 0, %s89
      %s90 = sphi 0, %s87
      %s91 = sphi 0, %s90
      %s107 = sphi 0, %s91
    $region4: #{tpu_custom_call.1} parent=1 // loop_header_branch
      %17 = sbr.rel (%p15) target = $region8
    $region5: #{tpu_custom_call.1} parent=1 // loop_body
      %s19 = ssub.s32 %s14, 1
      %s20 = ssub.s32 %s14, 2
      %s27 = sadd.s32 1, %s22
      %p28 = scmp.ge.s32.totalorder %s27, 1
      %s29 = scalar_select %p28, 0, %s27
      %s30 = sadd.s32 1, %s21
      %s31 = scalar_select %p28, %s30, %s21
      %p32 = scmp.ge.s32.totalorder %s31, 2
      %s33 = scalar_select %p32, 0, %s31
      %s34 = ssub.s32 %s21, %s33
      %s35 = ssub.s32 %s22, %s29
      %s36 = sor.u32 %s34, %s35
      %p37 = scmp.eq.s32.totalorder %s36, 0
      %s39 = sadd.s32 %s38, 1
      %s40 = scalar_select %p37, %s38, %s39
      %p43 = pneg %p37
      %p44 = scmp.eq.s32.totalorder %s14, 1
      %p45 = por %p43, %p44
      %p46 = scmp.ne.s32.totalorder %s38, %s41
      %p47 = scmp.eq.s32.totalorder %s14, 0
      %p48 = por %p46, %p47
      %p49 = scmp.ne.s32.totalorder %s38, %s41
      %p50 = scmp.eq.s32.totalorder %s19, 1
      %p51 = por %p49, %p50
      %p52 = scmp.ne.s32.totalorder %s41, %s42
      %p53 = scmp.eq.s32.totalorder %s19, 0
      %p54 = por %p52, %p53
      %p55 = scmp.ne.s32.totalorder %s41, %s42
      %p56 = scmp.eq.s32.totalorder %s20, 1
      %p57 = por %p55, %p56
      %p59 = scmp.ne.s32.totalorder %s42, %s58
      %p60 = scmp.eq.s32.totalorder %s20, 0
      %p61 = por %p59, %p60
      %s63 = sadd.s32 %s62, 1
      %p66 = scmp.eq.s32.totalorder %s14, 1
      %p67 = scmp.ne.s32.totalorder %s62, %s64
      %p68 = scmp.eq.s32.totalorder %s14, 0
      %p69 = por %p67, %p68
      %p70 = scmp.ne.s32.totalorder %s62, %s64
      %p71 = scmp.eq.s32.totalorder %s19, 1
      %p72 = por %p70, %p71
      %p73 = scmp.ne.s32.totalorder %s64, %s65
      %p74 = scmp.eq.s32.totalorder %s19, 0
      %p75 = por %p73, %p74
      %p76 = scmp.ne.s32.totalorder %s64, %s65
      %p77 = scmp.eq.s32.totalorder %s20, 1
      %p78 = por %p76, %p77
      %p80 = scmp.ne.s32.totalorder %s65, %s79
      %p81 = scmp.eq.s32.totalorder %s20, 0
      %p82 = por %p80, %p81
      %s83 = ssub.s32 %s21, %s33
      %s84 = ssub.s32 %s22, %s29
      %s85 = sor.u32 %s83, %s84
      %p86 = scmp.eq.s32.totalorder %s85, 0
      %s88 = sadd.s32 %s87, 1
      %s89 = scalar_select %p86, %s87, %s88
      %p92 = pneg %p86
      %p93 = scmp.eq.s32.totalorder %s14, 1
      %p94 = por %p92, %p93
      %p95 = scmp.ne.s32.totalorder %s87, %s90
      %p96 = scmp.eq.s32.totalorder %s14, 0
      %p97 = por %p95, %p96
      %p98 = scmp.ne.s32.totalorder %s87, %s90
      %p99 = scmp.eq.s32.totalorder %s19, 1
      %p100 = por %p98, %p99
      %p101 = scmp.ne.s32.totalorder %s90, %s91
      %p102 = scmp.eq.s32.totalorder %s19, 0
      %p103 = por %p101, %p102
      %p104 = scmp.ne.s32.totalorder %s90, %s91
      %p105 = scmp.eq.s32.totalorder %s20, 1
      %p106 = por %p104, %p105
      %p108 = scmp.ne.s32.totalorder %s91, %s107
      %p109 = scmp.eq.s32.totalorder %s20, 0
      %p110 = por %p108, %p109
      %p111 = scmp.le.s32.totalorder 1, %s14
      %p112 = scmp.lt.s32.totalorder %s14, 3
      %p113 = pnand %p111, %p112
      %p114 = pneg %p113
      // Predicated region
      $region9: #{tpu_custom_call.1} parent=5 // pred_check
        _
      $region10: #{tpu_custom_call.1} parent=5 // pred_check_branch
        %116 = sbr.rel (%p113) target = $region12
      $region11: #{tpu_custom_call.1} parent=5 // pred_region
        %s117 = ssub.s32 %s14, 1
        // Predicated region
        $region13: #{tpu_custom_call.1} parent=11 // pred_check
          %p118 = pneg %p75
        $region14: #{tpu_custom_call.1} parent=11 // pred_check_branch
          %120 = sbr.rel (%p118) target = $region16
        $region15: #{tpu_custom_call.1} parent=11 // pred_region
          _
        $region16: #{tpu_custom_call.1} parent=11 // pred_fallthru
          _
      $region12: #{tpu_custom_call.1} parent=5 // pred_fallthru
        _
      %p121 = scmp.lt.s32.totalorder %s14, 2
      // Predicated region
      $region17: #{tpu_custom_call.1} parent=5 // pred_check
        %p122 = pneg %p121
      $region18: #{tpu_custom_call.1} parent=5 // pred_check_branch
        %124 = sbr.rel (%p122) target = $region20
      $region19: #{tpu_custom_call.1} parent=5 // pred_region
        // Predicated region
        $region21: #{tpu_custom_call.1} parent=19 // pred_check
          %p125 = pneg %p48
        $region22: #{tpu_custom_call.1} parent=19 // pred_check_branch
          %127 = sbr.rel (%p125) target = $region24
        $region23: #{tpu_custom_call.1} parent=19 // pred_region
          %s128 = sand.u32 %s38, 1
          %s129 = scalar_lea.sflag [#allocation3], %s128
          %s130 = sand.u32 %s38, 1
          %s131 = smul.addr %s130, 8
          %s132 = scalar_lea.vmem [#allocation2], %s131
          %s133 = smul.u32 2, %s22
          %s135 = ssub.s32 128, 128
          %136 = vsyncadd %s129, %s135
          %s137 = smul.addr %s21, 2
          %s138 = sadd.s32 %s133, %s137
          %s139 = smul.addr %s138, 64
          %s140 = scalar_lea.hbm %s0, %s139
          %s142 = sshll.u32 %s132, 4
          %s143 = int_to_ptr.vmem [resolvable:$true] %s142
          %145 = dma.hbm_to_vmem [thread:$0]  %s140, 128, %s143, %s129
        $region24: #{tpu_custom_call.1} parent=19 // pred_fallthru
          _
      $region20: #{tpu_custom_call.1} parent=5 // pred_fallthru
        _
      %p146 = scmp.le.s32.totalorder 1, %s14
      %p147 = scmp.lt.s32.totalorder %s14, 3
      %p148 = pnand %p146, %p147
      %p149 = pneg %p148
      // Predicated region
      $region25: #{tpu_custom_call.1} parent=5 // pred_check
        _
      $region26: #{tpu_custom_call.1} parent=5 // pred_check_branch
        %151 = sbr.rel (%p148) target = $region28
      $region27: #{tpu_custom_call.1} parent=5 // pred_region
        %s152 = ssub.s32 %s14, 1
        %s153 = sand.u32 %s41, 1
        %s154 = scalar_lea.sflag [#allocation3], %s153
        %s155 = sand.u32 %s41, 1
        %s156 = smul.addr %s155, 8
        %s157 = scalar_lea.vmem [#allocation2], %s156
        // Predicated region
        $region29: #{tpu_custom_call.1} parent=27 // pred_check
          %p158 = pneg %p54
        $region30: #{tpu_custom_call.1} parent=27 // pred_check_branch
          %160 = sbr.rel (%p158) target = $region32
        $region31: #{tpu_custom_call.1} parent=27 // pred_region
          %161 = dma.done %s154, 128
        $region32: #{tpu_custom_call.1} parent=27 // pred_fallthru
          _
        %s162 = sand.u32 %s41, 1
        %s163 = scalar_lea.sflag [#allocation3], %s162
        %s164 = sand.u32 %s41, 1
        %s165 = smul.addr %s164, 8
        %s166 = scalar_lea.vmem [#allocation2], %s165
        %p167 = pneg %p54
        %p168 = pneg %p51
        %p169 = pneg %p75
        %p170 = pneg %p72
        %p171 = pneg %p103
        %p172 = pneg %p100
        %s173 = sand.u32 %s90, 1
        %s174 = scalar_lea.sflag [#allocation4], %s173
        %s175 = sand.u32 %s90, 1
        %s176 = smul.addr %s175, 8
        %s177 = scalar_lea.vmem [#allocation5], %s176
        %s178 = smul.u32 2, %s24
        %s179 = smul.u32 2, %s24
        %v180 = vld [vmem:[%s157] sm:$0xff]
        %v182 = vcombine.high %v180, %v180
        %vm184 = vcmask 1043456
        %v185 = vsel %vm184, %v180, 0.0
        %v186 = vrot.slane %v185, 4
        %v187 = vadd.f32 %v185, %v186
        %v188 = vrot.slane %v187, 2
        %v189 = vadd.f32 %v187, %v188
        %v190 = vrot.slane %v189, 1
        %v191 = vadd.f32 %v189, %v190
        %v192 = vsel %vm184, %v182, 0.0
        %v193 = vrot.slane %v192, 4
        %v194 = vadd.f32 %v192, %v193
        %v195 = vrot.slane %v194, 2
        %v196 = vadd.f32 %v194, %v195
        %v197 = vrot.slane %v196, 1
        %v198 = vadd.f32 %v196, %v197
        %v199 = vmul.f32 %v180, %v180
        %v201 = vcombine.high %v199, %v199
        %v203 = vsel %vm184, %v199, 0.0
        %v204 = vrot.slane %v203, 4
        %v205 = vadd.f32 %v203, %v204
        %v206 = vrot.slane %v205, 2
        %v207 = vadd.f32 %v205, %v206
        %v208 = vrot.slane %v207, 1
        %v209 = vadd.f32 %v207, %v208
        %v210 = vsel %vm184, %v201, 0.0
        %v211 = vrot.slane %v210, 4
        %v212 = vadd.f32 %v210, %v211
        %v213 = vrot.slane %v212, 2
        %v214 = vadd.f32 %v212, %v213
        %v215 = vrot.slane %v214, 1
        %v216 = vadd.f32 %v214, %v215
        %v217 = vmul.f32 %v191, 0.25
        %v218 = vmul.f32 %v198, 0.25
        %v219 = vmul.f32 %v209, 0.25
        %v220 = vmul.f32 %v216, 0.25
        %v221 = vmul.f32 %v217, %v217
        %v222 = vmul.f32 %v218, %v218
        %v223 = vsub.f32 %v219, %v221
        %v224 = vsub.f32 %v220, %v222
        %v225 = vmax.f32 %v223, 0.0
        %v226 = vmax.f32 %v224, 0.0
        %v227 = vadd.f32 %v225, 1e-06
        %v228 = vadd.f32 %v226, 1e-06
        %v229 = vrsqrt.pop %v227
        %v230 = vrsqrt.pop %v228
        %v231 = vld [vmem:[%s1] sm:$0xf]
        %s232 = scalar_lea.vmem %s1, 4
        %v233 = vld [vmem:[%s232] sm:$0xf]
        %v236 = vcombine.low %v217, %v218
        %v238 = vsub.f32 %v180, %v236
        %v241 = vcombine.low %v229, %v230
        %v243 = vmul.f32 %v238, %v241
        %245 = vset.pattern.permute.xlu0 0
        %246 = vperm.xlu0 %245, %v231
        %v247 = vpop.permute.xlu0 %246
        %v249 = vunpack.c.l.s4 839922192
        %v250 = vunpack.c.0.s8 %v249
        %v251 = vlaneseq
        %v252 = vshrl.u32 %v251, 7
        %v253 = vsub.s32 %v250, %v252
        %v254 = vrot.slane %v247, %v253
        %v256 = vmul.f32 %v243, %v254
        %258 = vset.pattern.permute.xlu0 0
        %259 = vperm.xlu0 %258, %v233
        %v260 = vpop.permute.xlu0 %259
        %v262 = vunpack.c.l.s4 839922192
        %v263 = vunpack.c.0.s8 %v262
        %v264 = vlaneseq
        %v265 = vshrl.u32 %v264, 7
        %v266 = vsub.s32 %v263, %v265
        %v267 = vrot.slane %v260, %v266
        %v269 = vadd.f32 %v256, %v267
        %270 = vst [vmem:[%s177] sm:$0xff] %v269
        %s271 = sand.u32 %s90, 1
        %s272 = scalar_lea.sflag [#allocation4], %s271
        %s273 = sand.u32 %s90, 1
        %s274 = smul.addr %s273, 8
        %s275 = scalar_lea.vmem [#allocation5], %s274
        // Predicated region
        $region33: #{tpu_custom_call.1} parent=27 // pred_check
          %p276 = pneg %p100
        $region34: #{tpu_custom_call.1} parent=27 // pred_check_branch
          %278 = sbr.rel (%p276) target = $region36
        $region35: #{tpu_custom_call.1} parent=27 // pred_region
          %s279 = smul.u32 2, %s24
          %s281 = ssub.s32 128, 128
          %282 = vsyncadd %s272, %s281
          %s283 = smul.addr %s23, 2
          %s284 = sadd.s32 %s279, %s283
          %s285 = smul.addr %s284, 64
          %s286 = scalar_lea.hbm %s2, %s285
          %s288 = sshll.u32 %s275, 4
          %s289 = int_to_ptr.vmem [resolvable:$true] %s288
          %291 = dma.vmem_to_hbm [thread:$0]  %s289, 128, %s286, %s272
        $region36: #{tpu_custom_call.1} parent=27 // pred_fallthru
          _
      $region28: #{tpu_custom_call.1} parent=5 // pred_fallthru
        _
      %p292 = scmp.le.s32.totalorder 2, %s14
      // Predicated region
      $region37: #{tpu_custom_call.1} parent=5 // pred_check
        %p293 = pneg %p292
      $region38: #{tpu_custom_call.1} parent=5 // pred_check_branch
        %295 = sbr.rel (%p293) target = $region40
      $region39: #{tpu_custom_call.1} parent=5 // pred_region
        %s296 = ssub.s32 %s14, 2
        // Predicated region
        $region41: #{tpu_custom_call.1} parent=39 // pred_check
          %p297 = pneg %p106
        $region42: #{tpu_custom_call.1} parent=39 // pred_check_branch
          %299 = sbr.rel (%p297) target = $region44
        $region43: #{tpu_custom_call.1} parent=39 // pred_region
          %s300 = sand.u32 %s91, 1
          %s301 = scalar_lea.sflag [#allocation4], %s300
          %s302 = sand.u32 %s91, 1
          %s303 = smul.addr %s302, 8
          %s304 = scalar_lea.vmem [#allocation5], %s303
          %305 = dma.done %s301, 128
        $region44: #{tpu_custom_call.1} parent=39 // pred_fallthru
          _
      $region40: #{tpu_custom_call.1} parent=5 // pred_fallthru
        _
    $region6: #{tpu_custom_call.1} parent=1 // loop_footer
      %s18 = sadd.s32 1, %s14
    $region7: #{tpu_custom_call.1} parent=1 // loop_footer_branch
      %13 = sbr.rel target = $region3
    $region8: #{tpu_custom_call.1} parent=1 // loop_exit
      _
    %306 = vsyncpa [#allocation3], 1
    %s307 = scalar_lea.sflag [#allocation3], 1
    %308 = vsyncpa %s307, 1
    %309 = vsyncpa [#allocation4], 1
    %s310 = scalar_lea.sflag [#allocation4], 1
    %311 = vsyncpa %s310, 1

</llo_original>
